<compile_context>
chip_gen: v7x
topology: tpu7x:2x2x1
jax: 0.10.0
libtpu: 0.0.40
codegen_flags: <defaults>
</compile_context>

<pallas_src>
import jax
import jax.numpy as jnp
from jax.experimental import pallas as pl
from jax.experimental.pallas import tpu as pltpu


def ae_one_six_kernel(x_ref, w1_ref, b1_ref, w4_ref, b4_ref, enc_ref, dec_ref):
    # x_ref : (P, TB) batch-on-lanes tile
    xT = x_ref[...]
    # fc1 + ReLU (encoder): (H, P) @ (P, TB) -> (H, TB)
    h = jnp.dot(w1_ref[...], xT, preferred_element_type=jnp.float32) + b1_ref[...]
    enc = jnp.maximum(h, 0.0)
    enc_ref[...] = enc.astype(enc_ref.dtype)
    # fc4 (decoder): (P, H) @ (H, TB) -> (P, TB)
    dec = jnp.dot(w4_ref[...], enc, preferred_element_type=jnp.float32) + b4_ref[...]
    dec_ref[...] = dec.astype(dec_ref.dtype)


def autoencoder_one_six(x, w1, b1, w4, b4, *, tile_b=1024):
    """x: (B, nb_param); w1: (hidden, nb_param)  [torch fc1.weight layout];
       b1: (hidden,);    w4: (nb_param, hidden)  [torch fc4.weight layout];
       b4: (nb_param,).
       Returns (encoder_out (B, hidden), decoder_out (B, nb_param))."""
    B, P = x.shape
    H = w1.shape[0]

    # Put batch on the lane axis: pad to a multiple of 128 lanes and tile it.
    B_lane = max(128, ((B + 127) // 128) * 128)
    TB = min(tile_b, B_lane)                     # 128..1024 lanes per grid step
    B_pad = ((B + TB - 1) // TB) * TB
    x_pad = jnp.pad(x.astype(jnp.float32), ((0, B_pad - B), (0, 0)))
    xT = x_pad.T                                 # (P, B_pad), lane-dense

    grid = (B_pad // TB,)

    cost = pl.CostEstimate(
        flops=2 * B_pad * (P * H + H * P),
        transcendentals=0,
        bytes_accessed=4 * (B_pad * (P + H + P) + H * P + H + P * H + P),
    )

    encT, decT = pl.pallas_call(
        ae_one_six_kernel,
        out_shape=(
            jax.ShapeDtypeStruct((H, B_pad), jnp.float32),
            jax.ShapeDtypeStruct((P, B_pad), jnp.float32),
        ),
        grid=grid,
        in_specs=[
            pl.BlockSpec((P, TB), lambda i: (0, i)),   # xT tile (batch on lanes)
            pl.BlockSpec((H, P), lambda i: (0, 0)),    # w1, resident
            pl.BlockSpec((H, 1), lambda i: (0, 0)),    # b1, resident
            pl.BlockSpec((P, H), lambda i: (0, 0)),    # w4, resident
            pl.BlockSpec((P, 1), lambda i: (0, 0)),    # b4, resident
        ],
        out_specs=(
            pl.BlockSpec((H, TB), lambda i: (0, i)),   # encT tile
            pl.BlockSpec((P, TB), lambda i: (0, i)),   # decT tile
        ),
        compiler_params=pltpu.CompilerParams(
            dimension_semantics=("parallel",),
            vmem_limit_bytes=32 * 1024 * 1024,  # tiny footprint; safe on v7x (64 MiB)
        ),
        cost_estimate=cost,
    )(xT, w1, b1.reshape(H, 1), w4, b4.reshape(P, 1))

    # Back to torch-style (batch, features) and drop padding rows.
    enc = encT.T[:B]
    dec = decT.T[:B]
    return enc, dec


def init_params(key, nb_param=2, hidden_size=6):
    # Deterministic synthetic init mimicking torch.nn.Linear's uniform(-1/sqrt(fan_in), ..)
    # Weights kept in torch layout: (out_features, in_features).
    k1, k2, k3, k4 = jax.random.split(key, 4)
    bound1 = 1.0 / jnp.sqrt(nb_param)
    bound4 = 1.0 / jnp.sqrt(hidden_size)
    w1 = jax.random.uniform(k1, (hidden_size, nb_param), jnp.float32, -bound1, bound1)
    b1 = jax.random.uniform(k2, (hidden_size,), jnp.float32, -bound1, bound1)
    w4 = jax.random.uniform(k3, (nb_param, hidden_size), jnp.float32, -bound4, bound4)
    b4 = jax.random.uniform(k4, (nb_param,), jnp.float32, -bound4, bound4)
    return w1, b1, w4, b4


if __name__ == "__main__":
    nb_param, hidden_size = 2, 6
    key = jax.random.PRNGKey(0)
    kx_small, kx_big, kp = jax.random.split(key, 3)
    w1, b1, w4, b4 = init_params(kp, nb_param, hidden_size)

    # Small batch (single grid step, padded lanes) and a larger batch that
    # exercises multiple grid steps + batch padding.
    for batch, kk in ((8, kx_small), (2500, kx_big)):
        x = jax.random.normal(kk, (batch, nb_param), jnp.float32)
        enc, dec = autoencoder_one_six(x, w1, b1, w4, b4)
        jax.block_until_ready((enc, dec))

        # reference check in plain JAX (torch semantics: y = x @ W^T + b)
        enc_ref = jnp.maximum(x @ w1.T + b1, 0.0)
        dec_ref = enc_ref @ w4.T + b4
        assert enc.shape == (batch, hidden_size) and dec.shape == (batch, nb_param)
        assert jnp.allclose(enc, enc_ref, atol=1e-5), "encoder mismatch"
        assert jnp.allclose(dec, dec_ref, atol=1e-5), "decoder mismatch"

    print("KERNEL_OK")
</pallas_src>

<mosaic_0001>
module attributes {stable_mosaic.version = 11 : i64} {
  func.func @ae_one_six_kernel(%arg0: i32, %arg1: memref<2x128xf32, #tpu.memory_space<vmem>>, %arg2: memref<6x2xf32, #tpu.memory_space<vmem>>, %arg3: memref<6x1xf32, #tpu.memory_space<vmem>>, %arg4: memref<2x6xf32, #tpu.memory_space<vmem>>, %arg5: memref<2x1xf32, #tpu.memory_space<vmem>>, %arg6: memref<6x128xf32, #tpu.memory_space<vmem>>, %arg7: memref<2x128xf32, #tpu.memory_space<vmem>>) attributes {dimension_semantics = [#tpu.dimension_semantics<parallel>], iteration_bounds = array<i64: 1>, scalar_prefetch = 0 : i64, scratch_operands = 0 : i64, tpu.core_type = #tpu.core_type<tc>, window_params = [{transform_indices = @transform_0, window_bounds = array<i64: 2, 128>}, {pipeline_mode = #tpu.pipeline_mode<synchronous>, transform_indices = @transform_1, window_bounds = array<i64: 6, 2>}, {pipeline_mode = #tpu.pipeline_mode<synchronous>, transform_indices = @transform_2, window_bounds = array<i64: 6, 1>}, {pipeline_mode = #tpu.pipeline_mode<synchronous>, transform_indices = @transform_3, window_bounds = array<i64: 2, 6>}, {pipeline_mode = #tpu.pipeline_mode<synchronous>, transform_indices = @transform_4, window_bounds = array<i64: 2, 1>}, {transform_indices = @transform_5, window_bounds = array<i64: 6, 128>}, {transform_indices = @transform_6, window_bounds = array<i64: 2, 128>}]} {
    %c0 = arith.constant 0 : index
    %c0_0 = arith.constant 0 : index
    %0 = vector.load %arg1[%c0, %c0_0] : memref<2x128xf32, #tpu.memory_space<vmem>>, vector<2x128xf32>
    %c0_1 = arith.constant 0 : index
    %c0_2 = arith.constant 0 : index
    %1 = vector.load %arg2[%c0_1, %c0_2] : memref<6x2xf32, #tpu.memory_space<vmem>>, vector<6x2xf32>
    %cst = arith.constant dense<0.000000e+00> : vector<6x128xf32>
    %2 = tpu.matmul %1, %0, %cst {dimension_numbers = #tpu.dot_dimension_numbers<[1], [0], [0], [1], [0, 0, 1, 1], [], []>} : vector<6x2xf32>, vector<2x128xf32>, vector<6x128xf32> -> vector<6x128xf32>
    %c0_3 = arith.constant 0 : index
    %c0_4 = arith.constant 0 : index
    %3 = vector.load %arg3[%c0_3, %c0_4] : memref<6x1xf32, #tpu.memory_space<vmem>>, vector<6x1xf32>
    %4 = vector.broadcast %3 : vector<6x1xf32> to vector<6x128xf32>
    %5 = arith.addf %2, %4 : vector<6x128xf32>
    %cst_5 = arith.constant 0.000000e+00 : f32
    %6 = vector.broadcast %cst_5 : f32 to vector<6x128xf32>
    %7 = arith.maximumf %5, %6 : vector<6x128xf32>
    %c0_6 = arith.constant 0 : index
    %c0_7 = arith.constant 0 : index
    %8 = vector.load %arg6[%c0_6, %c0_7] : memref<6x128xf32, #tpu.memory_space<vmem>>, vector<6x128xf32>
    tpu.vector_store %arg6[%c0_6, %c0_7], %7 {strides = array<i32>} : memref<6x128xf32, #tpu.memory_space<vmem>>, vector<6x128xf32>,
    %c0_8 = arith.constant 0 : index
    %c0_9 = arith.constant 0 : index
    %9 = vector.load %arg4[%c0_8, %c0_9] : memref<2x6xf32, #tpu.memory_space<vmem>>, vector<2x6xf32>
    %cst_10 = arith.constant dense<0.000000e+00> : vector<2x128xf32>
    %10 = tpu.matmul %9, %7, %cst_10 {dimension_numbers = #tpu.dot_dimension_numbers<[1], [0], [0], [1], [0, 0, 1, 1], [], []>} : vector<2x6xf32>, vector<6x128xf32>, vector<2x128xf32> -> vector<2x128xf32>
    %c0_11 = arith.constant 0 : index
    %c0_12 = arith.constant 0 : index
    %11 = vector.load %arg5[%c0_11, %c0_12] : memref<2x1xf32, #tpu.memory_space<vmem>>, vector<2x1xf32>
    %12 = vector.broadcast %11 : vector<2x1xf32> to vector<2x128xf32>
    %13 = arith.addf %10, %12 : vector<2x128xf32>
    %c0_13 = arith.constant 0 : index
    %c0_14 = arith.constant 0 : index
    %14 = vector.load %arg7[%c0_13, %c0_14] : memref<2x128xf32, #tpu.memory_space<vmem>>, vector<2x128xf32>
    tpu.vector_store %arg7[%c0_13, %c0_14], %13 {strides = array<i32>} : memref<2x128xf32, #tpu.memory_space<vmem>>, vector<2x128xf32>,
    return
  }
  func.func @transform_0(%arg0: i32) -> (i32, i32) {
    %c0_i32 = arith.constant 0 : i32
    %c0_i32_0 = arith.constant 0 : i32
    return %c0_i32, %arg0 : i32, i32
  }
  func.func @transform_1(%arg0: i32) -> (i32, i32) {
    %c0_i32 = arith.constant 0 : i32
    %c0_i32_0 = arith.constant 0 : i32
    %c0_i32_1 = arith.constant 0 : i32
    return %c0_i32, %c0_i32_0 : i32, i32
  }
  func.func @transform_2(%arg0: i32) -> (i32, i32) {
    %c0_i32 = arith.constant 0 : i32
    %c0_i32_0 = arith.constant 0 : i32
    %c0_i32_1 = arith.constant 0 : i32
    return %c0_i32, %c0_i32_0 : i32, i32
  }
  func.func @transform_3(%arg0: i32) -> (i32, i32) {
    %c0_i32 = arith.constant 0 : i32
    %c0_i32_0 = arith.constant 0 : i32
    %c0_i32_1 = arith.constant 0 : i32
    return %c0_i32, %c0_i32_0 : i32, i32
  }
  func.func @transform_4(%arg0: i32) -> (i32, i32) {
    %c0_i32 = arith.constant 0 : i32
    %c0_i32_0 = arith.constant 0 : i32
    %c0_i32_1 = arith.constant 0 : i32
    return %c0_i32, %c0_i32_0 : i32, i32
  }
  func.func @transform_5(%arg0: i32) -> (i32, i32) {
    %c0_i32 = arith.constant 0 : i32
    %c0_i32_0 = arith.constant 0 : i32
    return %c0_i32, %arg0 : i32, i32
  }
  func.func @transform_6(%arg0: i32) -> (i32, i32) {
    %c0_i32 = arith.constant 0 : i32
    %c0_i32_0 = arith.constant 0 : i32
    return %c0_i32, %arg0 : i32, i32
  }
}

</mosaic_0001>

<llo_original>
// kernel: tpu_custom_call.1
$region0: #{tpu_custom_call.1}
  #allocation0 [shape = 'u32[]', space=smem, size = 0x4, offset = 0x4, fixed_abs, tag = 'smem constant byte address 0x4 - core index']
  #allocation1 [shape = 'u32[144,128]{1,0:T(1,128)}', space=vmem, size = 0x12000, scoped, tag = 'internal scratch']
  %s0 = inlined_call_operand.vmem [shape: f32[2,128], index: 0, kind: input, shape index: {}]
  %s1 = inlined_call_operand.vmem [shape: f32[6,2], index: 1, kind: input, shape index: {}]
  %s2 = inlined_call_operand.vmem [shape: f32[6,1], index: 2, kind: input, shape index: {}]
  %s3 = inlined_call_operand.vmem [shape: f32[2,6], index: 3, kind: input, shape index: {}]
  %s4 = inlined_call_operand.vmem [shape: f32[2,1], index: 4, kind: input, shape index: {}]
  %s5 = inlined_call_operand.hbm [shape: f32[6,128], index: 5, kind: output, shape index: {0}]
  %s6 = inlined_call_operand.hbm [shape: f32[2,128], index: 6, kind: output, shape index: {1}]
  %7 = xla_tuple %s5, %s6
  %s8 = sld [smem:[#allocation0]]
  $region38: #{tpu_custom_call.1} parent=0
    _
  %s10 = ssub.s32 1, %s8
  %s11 = scalar_select 0, %s10, %s8
  $region1: #{tpu_custom_call.1} parent=0
    #allocation2 [shape = 'u8[4096]{0}', space=vmem, size = 0x1000, scoped, tag = 'output window, operand 0, single buffered']
    #allocation3 [shape = 's32[1]{0}', space=sflag, size = 0x4, scoped, tag = 'scoped memory for tpu_custom_call.1']
    #allocation4 [shape = 'u8[1024]{0}', space=vmem, size = 0x400, scoped, tag = 'output window, operand 1, single buffered']
    #allocation5 [shape = 's32[1]{0}', space=sflag, size = 0x4, scoped, tag = 'scoped memory for tpu_custom_call.1']
    %12 = vsyncpa [#allocation3], 0
    %13 = vsyncpa [#allocation5], 0
    // Predicated region
    $region2: #{tpu_custom_call.1} parent=1 // pred_check
      _
    $region3: #{tpu_custom_call.1} parent=1 // pred_check_branch
      %15 = sbr.rel (0) target = $region5
    $region4: #{tpu_custom_call.1} parent=1 // pred_region
      _
    $region5: #{tpu_custom_call.1} parent=1 // pred_fallthru
      _
    // Predicated region
    $region6: #{tpu_custom_call.1} parent=1 // pred_check
      _
    $region7: #{tpu_custom_call.1} parent=1 // pred_check_branch
      %17 = sbr.rel (0) target = $region9
    $region8: #{tpu_custom_call.1} parent=1 // pred_region
      _
    $region9: #{tpu_custom_call.1} parent=1 // pred_fallthru
      _
    // Predicated region
    $region10: #{tpu_custom_call.1} parent=1 // pred_check
      _
    $region11: #{tpu_custom_call.1} parent=1 // pred_check_branch
      %19 = sbr.rel (0) target = $region13
    $region12: #{tpu_custom_call.1} parent=1 // pred_region
      _
    $region13: #{tpu_custom_call.1} parent=1 // pred_fallthru
      _
    // Predicated region
    $region14: #{tpu_custom_call.1} parent=1 // pred_check
      _
    $region15: #{tpu_custom_call.1} parent=1 // pred_check_branch
      %21 = sbr.rel (0) target = $region17
    $region16: #{tpu_custom_call.1} parent=1 // pred_region
      _
    $region17: #{tpu_custom_call.1} parent=1 // pred_fallthru
      _
    // Predicated region
    $region18: #{tpu_custom_call.1} parent=1 // pred_check
      _
    $region19: #{tpu_custom_call.1} parent=1 // pred_check_branch
      %23 = sbr.rel (0) target = $region21
    $region20: #{tpu_custom_call.1} parent=1 // pred_region
      _
    $region21: #{tpu_custom_call.1} parent=1 // pred_fallthru
      _
    %v24 = vld [vmem:[%s0] sm:$0x3]
    %v25 = vld [vmem:[%s1] sm:$0x3f]
    %v26 = vld [vmem:[%s2] sm:$0x3f]
    %28 = vset.pattern.permute.xlu0 0
    %29 = vperm.xlu0 %28, %v26
    %v30 = vpop.permute.xlu0 %29
    %vm32 = vcmask 15360
    %v34 = vsel %vm32, %v25, 0
    %vm36 = vcmask 1041408
    %v38 = vsel %vm36, %v24, 0
    %40 = vmatprep.subr.mxu0 0.0
    %41 = vmatpush1.msra.mxu0 %v38
    %42 = vmatprep.subr.mxu0 0.0
    %43 = vmatpush1.msra.mxu0 0.0
    %44 = vmatprep.subr.mxu0 0.0
    %45 = vmatpush1.msra.mxu0 0.0
    %46 = vmatprep.subr.mxu0 0.0
    %47 = vmatpush1.msra.mxu0 0.0
    %48 = vmatprep.subr.mxu0 0.0
    %49 = vmatpush1.msra.mxu0 0.0
    %50 = vmatprep.subr.mxu0 0.0
    %51 = vmatpush1.msra.mxu0 0.0
    %52 = vmatprep.subr.mxu0 0.0
    %53 = vmatpush1.msra.mxu0 0.0
    %54 = vmatprep.subr.mxu0 0.0
    %55 = vmatpush1.msra.mxu0 0.0
    %56 = vmatprep.subr.mxu0 0.0
    %57 = vmatpush1.msra.mxu0 0.0
    %58 = vmatprep.subr.mxu0 0.0
    %59 = vmatpush1.msra.mxu0 0.0
    %60 = vmatprep.subr.mxu0 0.0
    %61 = vmatpush1.msra.mxu0 0.0
    %62 = vmatprep.subr.mxu0 0.0
    %63 = vmatpush1.msra.mxu0 0.0
    %64 = vmatprep.subr.mxu0 0.0
    %65 = vmatpush1.msra.mxu0 0.0
    %66 = vmatprep.subr.mxu0 0.0
    %67 = vmatpush1.msra.mxu0 0.0
    %68 = vmatprep.subr.mxu0 0.0
    %69 = vmatpush1.msra.mxu0 0.0
    %70 = vmatprep.subr.mxu0 0.0
    %71 = vmatpush1.msra.mxu0 0.0
    %72 = vmatprep.subr.mxu0 0.0
    %73 = vmatpush1.msra.mxu0 0.0
    %74 = vmatprep.subr.mxu0 0.0
    %75 = vmatpush1.msra.mxu0 0.0
    %76 = vmatprep.subr.mxu0 0.0
    %77 = vmatpush1.msra.mxu0 0.0
    %78 = vmatprep.subr.mxu0 0.0
    %79 = vmatpush1.msra.mxu0 0.0
    %80 = vmatprep.subr.mxu0 0.0
    %81 = vmatpush1.msra.mxu0 0.0
    %82 = vmatprep.subr.mxu0 0.0
    %83 = vmatpush1.msra.mxu0 0.0
    %84 = vmatprep.subr.mxu0 0.0
    %85 = vmatpush1.msra.mxu0 0.0
    %86 = vmatprep.subr.mxu0 0.0
    %87 = vmatpush1.msra.mxu0 0.0
    %88 = vmatprep.subr.mxu0 0.0
    %89 = vmatpush1.msra.mxu0 0.0
    %90 = vmatprep.subr.mxu0 0.0
    %91 = vmatpush1.msra.mxu0 0.0
    %92 = vmatprep.subr.mxu0 0.0
    %93 = vmatpush1.msra.mxu0 0.0
    %94 = vmatprep.subr.mxu0 0.0
    %95 = vmatpush1.msra.mxu0 0.0
    %96 = vmatprep.subr.mxu0 0.0
    %97 = vmatpush1.msra.mxu0 0.0
    %98 = vmatprep.subr.mxu0 0.0
    %99 = vmatpush1.msra.mxu0 0.0
    %100 = vmatprep.subr.mxu0 0.0
    %101 = vmatpush1.msra.mxu0 0.0
    %102 = vmatprep.subr.mxu0 0.0
    %103 = vmatpush1.msra.mxu0 0.0
    %104 = vmatprep.mubr.f32.mxu0 0.0
    %105 = vmatmul.mubr.f32.gmra.mrb[0].mxu0 %v34
    %v106 = vpop.f32.mrb[0].mxu0
    %v107 = vadd.f32 %v30, %v106
    %v108 = vpop.f32.mrb[0].mxu0
    %109 = vdwg.mxu0
    %v110 = vmax.f32 %v107, 0.0
    %111 = vst [vmem:[#allocation2] sm:$0x3f] %v110
    %v112 = vld [vmem:[%s3] sm:$0x3]
    %v113 = vld [vmem:[%s4] sm:$0x3]
    %115 = vset.pattern.permute.xlu0 0
    %116 = vperm.xlu0 %115, %v113
    %v117 = vpop.permute.xlu0 %116
    %vm119 = vcmask 48128
    %v121 = vsel %vm119, %v112, 0
    %vm123 = vcmask 1045504
    %v125 = vsel %vm123, %v110, 0
    %127 = vmatprep.subr.mxu0 0.0
    %128 = vmatpush1.msra.mxu0 %v125
    %129 = vmatprep.subr.mxu0 0.0
    %130 = vmatpush1.msra.mxu0 0.0
    %131 = vmatprep.subr.mxu0 0.0
    %132 = vmatpush1.msra.mxu0 0.0
    %133 = vmatprep.subr.mxu0 0.0
    %134 = vmatpush1.msra.mxu0 0.0
    %135 = vmatprep.subr.mxu0 0.0
    %136 = vmatpush1.msra.mxu0 0.0
    %137 = vmatprep.subr.mxu0 0.0
    %138 = vmatpush1.msra.mxu0 0.0
    %139 = vmatprep.subr.mxu0 0.0
    %140 = vmatpush1.msra.mxu0 0.0
    %141 = vmatprep.subr.mxu0 0.0
    %142 = vmatpush1.msra.mxu0 0.0
    %143 = vmatprep.subr.mxu0 0.0
    %144 = vmatpush1.msra.mxu0 0.0
    %145 = vmatprep.subr.mxu0 0.0
    %146 = vmatpush1.msra.mxu0 0.0
    %147 = vmatprep.subr.mxu0 0.0
    %148 = vmatpush1.msra.mxu0 0.0
    %149 = vmatprep.subr.mxu0 0.0
    %150 = vmatpush1.msra.mxu0 0.0
    %151 = vmatprep.subr.mxu0 0.0
    %152 = vmatpush1.msra.mxu0 0.0
    %153 = vmatprep.subr.mxu0 0.0
    %154 = vmatpush1.msra.mxu0 0.0
    %155 = vmatprep.subr.mxu0 0.0
    %156 = vmatpush1.msra.mxu0 0.0
    %157 = vmatprep.subr.mxu0 0.0
    %158 = vmatpush1.msra.mxu0 0.0
    %159 = vmatprep.subr.mxu0 0.0
    %160 = vmatpush1.msra.mxu0 0.0
    %161 = vmatprep.subr.mxu0 0.0
    %162 = vmatpush1.msra.mxu0 0.0
    %163 = vmatprep.subr.mxu0 0.0
    %164 = vmatpush1.msra.mxu0 0.0
    %165 = vmatprep.subr.mxu0 0.0
    %166 = vmatpush1.msra.mxu0 0.0
    %167 = vmatprep.subr.mxu0 0.0
    %168 = vmatpush1.msra.mxu0 0.0
    %169 = vmatprep.subr.mxu0 0.0
    %170 = vmatpush1.msra.mxu0 0.0
    %171 = vmatprep.subr.mxu0 0.0
    %172 = vmatpush1.msra.mxu0 0.0
    %173 = vmatprep.subr.mxu0 0.0
    %174 = vmatpush1.msra.mxu0 0.0
    %175 = vmatprep.subr.mxu0 0.0
    %176 = vmatpush1.msra.mxu0 0.0
    %177 = vmatprep.subr.mxu0 0.0
    %178 = vmatpush1.msra.mxu0 0.0
    %179 = vmatprep.subr.mxu0 0.0
    %180 = vmatpush1.msra.mxu0 0.0
    %181 = vmatprep.subr.mxu0 0.0
    %182 = vmatpush1.msra.mxu0 0.0
    %183 = vmatprep.subr.mxu0 0.0
    %184 = vmatpush1.msra.mxu0 0.0
    %185 = vmatprep.subr.mxu0 0.0
    %186 = vmatpush1.msra.mxu0 0.0
    %187 = vmatprep.subr.mxu0 0.0
    %188 = vmatpush1.msra.mxu0 0.0
    %189 = vmatprep.subr.mxu0 0.0
    %190 = vmatpush1.msra.mxu0 0.0
    %191 = vmatprep.mubr.f32.mxu0 0.0
    %192 = vmatmul.mubr.f32.gmra.mrb[0].mxu0 %v121
    %v193 = vpop.f32.mrb[0].mxu0
    %v194 = vadd.f32 %v117, %v193
    %v195 = vpop.f32.mrb[0].mxu0
    %196 = vdwg.mxu0
    %197 = vst [vmem:[#allocation4] sm:$0x3] %v194
    // Predicated region
    $region22: #{tpu_custom_call.1} parent=1 // pred_check
      _
    $region23: #{tpu_custom_call.1} parent=1 // pred_check_branch
      %199 = sbr.rel (0) target = $region25
    $region24: #{tpu_custom_call.1} parent=1 // pred_region
      %s201 = ssub.s32 128, 128
      %202 = vsyncadd [#allocation3], %s201
      %s204 = sshll.u32 [#allocation2], 4
      %s205 = int_to_ptr.vmem [resolvable:$true] %s204
      %207 = dma.vmem_to_hbm [thread:$0]  %s205, 128, %s5, [#allocation3]
    $region25: #{tpu_custom_call.1} parent=1 // pred_fallthru
      _
    // Predicated region
    $region26: #{tpu_custom_call.1} parent=1 // pred_check
      _
    $region27: #{tpu_custom_call.1} parent=1 // pred_check_branch
      %209 = sbr.rel (0) target = $region29
    $region28: #{tpu_custom_call.1} parent=1 // pred_region
      %s211 = ssub.s32 32, 32
      %212 = vsyncadd [#allocation5], %s211
      %s214 = sshll.u32 [#allocation4], 4
      %s215 = int_to_ptr.vmem [resolvable:$true] %s214
      %217 = dma.vmem_to_hbm [thread:$0]  %s215, 32, %s6, [#allocation5]
    $region29: #{tpu_custom_call.1} parent=1 // pred_fallthru
      _
    // Predicated region
    $region30: #{tpu_custom_call.1} parent=1 // pred_check
      _
    $region31: #{tpu_custom_call.1} parent=1 // pred_check_branch
      %219 = sbr.rel (0) target = $region33
    $region32: #{tpu_custom_call.1} parent=1 // pred_region
      %220 = dma.done [#allocation3], 128
    $region33: #{tpu_custom_call.1} parent=1 // pred_fallthru
      _
    // Predicated region
    $region34: #{tpu_custom_call.1} parent=1 // pred_check
      _
    $region35: #{tpu_custom_call.1} parent=1 // pred_check_branch
      %222 = sbr.rel (0) target = $region37
    $region36: #{tpu_custom_call.1} parent=1 // pred_region
      %223 = dma.done [#allocation5], 32
    $region37: #{tpu_custom_call.1} parent=1 // pred_fallthru
      _
    %224 = vsyncpa [#allocation3], 1
    %225 = vsyncpa [#allocation5], 1

</llo_original>
